<compile_context>
chip_gen: v7x
topology: tpu7x:2x2x1
jax: 0.10.0
libtpu: 0.0.40
codegen_flags: <defaults>
</compile_context>

<pallas_src>
import functools

import jax
import jax.numpy as jnp
from jax.experimental import pallas as pl
from jax.experimental.pallas import tpu as pltpu


# ---------------------------------------------------------------------------
# Fused matmul kernel: out = act(BatchNorm(A @ B + bias))
# ---------------------------------------------------------------------------
def _matmul_fused_kernel(a_ref, b_ref, bias_ref, o_ref, *, bn, act, eps):
    """Grid = (N tiles ["parallel"], K tiles ["arbitrary"]).

    The output block index is constant across the K axis, so o_ref stays
    resident in VMEM across the reduction and is used directly as the f32
    accumulator (no scratch buffer).  Bias / batch-stat BatchNorm (per-column
    over the M rows) / activation run in the last-K epilogue.
    """
    k = pl.program_id(1)

    @pl.when(k == 0)
    def _():
        o_ref[...] = jnp.zeros_like(o_ref)

    o_ref[...] += jnp.dot(a_ref[...], b_ref[...],
                          preferred_element_type=jnp.float32)

    @pl.when(k == pl.num_programs(1) - 1)
    def _():
        y = o_ref[...] + bias_ref[...]
        if bn:
            mean = jnp.mean(y, axis=0, keepdims=True)
            var = jnp.mean((y - mean) ** 2, axis=0, keepdims=True)
            y = (y - mean) * jax.lax.rsqrt(var + eps)
        if act == "relu":
            y = jnp.maximum(y, 0.0)
        elif act == "sigmoid":
            y = jax.nn.sigmoid(y)
        o_ref[...] = y.astype(o_ref.dtype)


def matmul_fused(a, b, bias, *, bn=False, act=None, tn=None, tk=None):
    """a: (M, K), b: (K, N), bias: (1, N) -> (M, N) f32."""
    M, K = a.shape
    K2, N = b.shape
    assert K == K2 and bias.shape == (1, N)
    tn = N if tn is None else tn
    tk = K if tk is None else tk
    assert N % tn == 0 and K % tk == 0
    grid = (N // tn, K // tk)
    return pl.pallas_call(
        functools.partial(_matmul_fused_kernel, bn=bn, act=act, eps=1e-5),
        out_shape=jax.ShapeDtypeStruct((M, N), jnp.float32),
        grid_spec=pltpu.PrefetchScalarGridSpec(
            num_scalar_prefetch=0,
            grid=grid,
            in_specs=[
                pl.BlockSpec((M, tk), lambda j, k: (0, k)),
                pl.BlockSpec((tk, tn), lambda j, k: (k, j)),
                pl.BlockSpec((1, tn), lambda j, k: (0, j)),
            ],
            out_specs=pl.BlockSpec((M, tn), lambda j, k: (0, j)),
        ),
        compiler_params=pltpu.CompilerParams(
            dimension_semantics=("parallel", "arbitrary"),
            vmem_limit_bytes=32 * 1024 * 1024),
    )(a, b, bias)


# ---------------------------------------------------------------------------
# ConvTranspose2d lowering glue (host-side XLA slicing, feeds the Pallas matmul)
# ---------------------------------------------------------------------------
def convt_im2col(x_nhwc, k, s, p):
    """ConvTranspose(k, s, p) as a stride-1 conv: zero-dilate the input with
    (s-1) interior zeros, pad by (k-1-p), extract k x k stride-1 patches.
    Patch column order is (kh, kw, cin), matching the pre-laid-out weight rows
    (the spatial flip is folded into the weights at init)."""
    N, H, W, C = x_nhwc.shape
    pad = k - 1 - p
    xp = jax.lax.pad(
        x_nhwc, jnp.array(0.0, x_nhwc.dtype),
        ((0, 0, 0), (pad, pad, s - 1), (pad, pad, s - 1), (0, 0, 0)))
    Ho = xp.shape[1] - k + 1
    Wo = xp.shape[2] - k + 1
    cols = [xp[:, i:i + Ho, j:j + Wo, :] for i in range(k) for j in range(k)]
    patches = jnp.concatenate(cols, axis=-1)          # (N, Ho, Wo, k*k*C)
    return patches.reshape(N * Ho * Wo, k * k * C), Ho, Wo


# ---------------------------------------------------------------------------
# Parameters (generated directly in matmul-ready layout; matches
# initialize_weights: Normal(0, 0.02) weights, zero biases, default BN)
# ---------------------------------------------------------------------------
def init_params(key):
    ks = jax.random.split(key, 4)
    std = 0.02
    return {
        # Linear(62, 1024): stored (in, out)
        "fc1_w": jax.random.normal(ks[0], (62, 1024), jnp.float32) * std,
        "fc1_b": jnp.zeros((1, 1024), jnp.float32),
        # Linear(1024, 6272): stored (in, out) with output columns ordered
        # (h, w, c) so the NCHW view becomes a free NHWC reshape; bf16 halves
        # the dominant HBM weight stream (accumulation stays f32).
        "fc2_w": (jax.random.normal(ks[1], (1024, 128 * 7 * 7), jnp.float32)
                  * std).astype(jnp.bfloat16),
        "fc2_b": jnp.zeros((1, 128 * 7 * 7), jnp.float32),
        # ConvTranspose2d(128, 64, 4, 2, 1) as im2col matmul:
        # rows ordered (kh, kw, cin) with the spatial flip folded in.
        "dc1_w": jax.random.normal(ks[2], (4 * 4 * 128, 64), jnp.float32) * std,
        "dc1_b": jnp.zeros((1, 64), jnp.float32),
        # ConvTranspose2d(64, 1, 4, 2, 1)
        "dc2_w": jax.random.normal(ks[3], (4 * 4 * 64, 1), jnp.float32) * std,
        "dc2_b": jnp.zeros((1, 1), jnp.float32),
    }


# ---------------------------------------------------------------------------
# Generator forward
# ---------------------------------------------------------------------------
def generator_forward(z, params):
    """z: (N, 62) latent -> (N, 1, 28, 28) image in [0, 1]."""
    N = z.shape[0]

    # Linear(62, 1024) + BatchNorm1d(1024) + ReLU   (N tiled for megacore)
    h = matmul_fused(z.astype(jnp.float32), params["fc1_w"], params["fc1_b"],
                     bn=True, act="relu", tn=512)                  # (N, 1024)

    # Linear(1024, 6272) + BatchNorm1d(6272) + ReLU (bf16 weight stream)
    h = matmul_fused(h.astype(jnp.bfloat16), params["fc2_w"], params["fc2_b"],
                     bn=True, act="relu", tn=896)                  # (N, 6272)

    # PyTorch view(-1, 128, 7, 7): columns are already (h, w, c) -> free NHWC
    x = h.reshape(N, 7, 7, 128)

    # ConvTranspose2d(128, 64, 4, 2, 1) + BatchNorm2d(64) + ReLU  (7x7 -> 14x14)
    a, Ho, Wo = convt_im2col(x, 4, 2, 1)                           # (N*196, 2048)
    h = matmul_fused(a, params["dc1_w"], params["dc1_b"],
                     bn=True, act="relu")                          # (N*196, 64)
    x = h.reshape(N, Ho, Wo, 64)

    # ConvTranspose2d(64, 1, 4, 2, 1) + Sigmoid                    (14x14 -> 28x28)
    a, Ho, Wo = convt_im2col(x, 4, 2, 1)                           # (N*784, 1024)
    h = matmul_fused(a, params["dc2_w"], params["dc2_b"],
                     bn=False, act="sigmoid")                      # (N*784, 1)
    out = h.reshape(N, Ho, Wo, 1)
    return jnp.transpose(out, (0, 3, 1, 2))                        # NCHW


if __name__ == "__main__":
    key = jax.random.PRNGKey(0)
    k_in, k_par = jax.random.split(key)
    # Small batch of 2; latent size 62 is fixed by nn.Linear(62, 1024).
    z = jax.random.normal(k_in, (2, 62), jnp.float32)
    params = init_params(k_par)

    out = jax.block_until_ready(generator_forward(z, params))
    assert out.shape == (2, 1, 28, 28)
    assert bool(jnp.all((out >= 0.0) & (out <= 1.0)))
    print("KERNEL_OK")
</pallas_src>

<mosaic_0001>
module attributes {stable_mosaic.version = 11 : i64} {
  func.func @_matmul_fused_kernel(%arg0: i32, %arg1: i32, %arg2: memref<2x62xf32, #tpu.memory_space<vmem>>, %arg3: memref<62x512xf32, #tpu.memory_space<vmem>>, %arg4: memref<1x512xf32, #tpu.memory_space<vmem>>, %arg5: memref<2x512xf32, #tpu.memory_space<vmem>>) attributes {dimension_semantics = [#tpu.dimension_semantics<parallel>, #tpu.dimension_semantics<arbitrary>], iteration_bounds = array<i64: 2, 1>, scalar_prefetch = 0 : i64, scratch_operands = 0 : i64, tpu.core_type = #tpu.core_type<tc>, window_params = [{transform_indices = @transform_0, window_bounds = array<i64: 2, 62>}, {transform_indices = @transform_1, window_bounds = array<i64: 62, 512>}, {transform_indices = @transform_2, window_bounds = array<i64: 1, 512>}, {transform_indices = @transform_3, window_bounds = array<i64: 2, 512>}]} {
    %c0_i32 = arith.constant 0 : i32
    %0 = arith.cmpi eq, %arg1, %c0_i32 : i32
    %1 = arith.extui %0 : i1 to i32
    %c0_i32_0 = arith.constant 0 : i32
    %2 = arith.cmpi ne, %1, %c0_i32_0 : i32
    scf.if %2 {
      %cst_10 = arith.constant 0.000000e+00 : f32
      %12 = vector.broadcast %cst_10 : f32 to vector<2x512xf32>
      %c0_11 = arith.constant 0 : index
      %c0_12 = arith.constant 0 : index
      %13 = vector.load %arg5[%c0_11, %c0_12] : memref<2x512xf32, #tpu.memory_space<vmem>>, vector<2x512xf32>
      tpu.vector_store %arg5[%c0_11, %c0_12], %12 {strides = array<i32>} : memref<2x512xf32, #tpu.memory_space<vmem>>, vector<2x512xf32>,
    } else {
    }
    %c0 = arith.constant 0 : index
    %c0_1 = arith.constant 0 : index
    %3 = vector.load %arg5[%c0, %c0_1] : memref<2x512xf32, #tpu.memory_space<vmem>>, vector<2x512xf32>
    %c0_2 = arith.constant 0 : index
    %c0_3 = arith.constant 0 : index
    %4 = vector.load %arg2[%c0_2, %c0_3] : memref<2x62xf32, #tpu.memory_space<vmem>>, vector<2x62xf32>
    %c0_4 = arith.constant 0 : index
    %c0_5 = arith.constant 0 : index
    %5 = vector.load %arg3[%c0_4, %c0_5] : memref<62x512xf32, #tpu.memory_space<vmem>>, vector<62x512xf32>
    %cst = arith.constant dense<0.000000e+00> : vector<2x512xf32>
    %6 = tpu.matmul %4, %5, %cst {dimension_numbers = #tpu.dot_dimension_numbers<[1], [0], [0], [1], [0, 0, 1, 1], [], []>} : vector<2x62xf32>, vector<62x512xf32>, vector<2x512xf32> -> vector<2x512xf32>
    %7 = arith.addf %3, %6 : vector<2x512xf32>
    %c0_6 = arith.constant 0 : index
    %c0_7 = arith.constant 0 : index
    %8 = vector.load %arg5[%c0_6, %c0_7] : memref<2x512xf32, #tpu.memory_space<vmem>>, vector<2x512xf32>
    tpu.vector_store %arg5[%c0_6, %c0_7], %7 {strides = array<i32>} : memref<2x512xf32, #tpu.memory_space<vmem>>, vector<2x512xf32>,
    %c0_i32_8 = arith.constant 0 : i32
    %9 = arith.cmpi eq, %arg1, %c0_i32_8 : i32
    %10 = arith.extui %9 : i1 to i32
    %c0_i32_9 = arith.constant 0 : i32
    %11 = arith.cmpi ne, %10, %c0_i32_9 : i32
    scf.if %11 {
      %c0_10 = arith.constant 0 : index
      %c0_11 = arith.constant 0 : index
      %12 = vector.load %arg5[%c0_10, %c0_11] : memref<2x512xf32, #tpu.memory_space<vmem>>, vector<2x512xf32>
      %c0_12 = arith.constant 0 : index
      %c0_13 = arith.constant 0 : index
      %13 = vector.load %arg4[%c0_12, %c0_13] : memref<1x512xf32, #tpu.memory_space<vmem>>, vector<1x512xf32>
      %14 = vector.broadcast %13 : vector<1x512xf32> to vector<2x512xf32>
      %15 = arith.addf %12, %14 : vector<2x512xf32>
      %cst_14 = arith.constant dense<0.000000e+00> : vector<512xf32>
      %16 = vector.multi_reduction <add>, %15, %cst_14 [0] : vector<2x512xf32> to vector<512xf32>
      %17 = vector.shape_cast %16 : vector<512xf32> to vector<1x512xf32>
      %cst_15 = arith.constant 2.000000e+00 : f32
      %18 = vector.broadcast %cst_15 : f32 to vector<1x512xf32>
      %19 = arith.divf %17, %18 : vector<1x512xf32>
      %20 = vector.broadcast %19 : vector<1x512xf32> to vector<2x512xf32>
      %21 = arith.subf %15, %20 : vector<2x512xf32>
      %22 = arith.mulf %21, %21 : vector<2x512xf32>
      %cst_16 = arith.constant dense<0.000000e+00> : vector<512xf32>
      %23 = vector.multi_reduction <add>, %22, %cst_16 [0] : vector<2x512xf32> to vector<512xf32>
      %24 = vector.shape_cast %23 : vector<512xf32> to vector<1x512xf32>
      %cst_17 = arith.constant 2.000000e+00 : f32
      %25 = vector.broadcast %cst_17 : f32 to vector<1x512xf32>
      %26 = arith.divf %24, %25 : vector<1x512xf32>
      %27 = vector.broadcast %19 : vector<1x512xf32> to vector<2x512xf32>
      %28 = arith.subf %15, %27 : vector<2x512xf32>
      %cst_18 = arith.constant 9.99999974E-6 : f32
      %29 = vector.broadcast %cst_18 : f32 to vector<1x512xf32>
      %30 = arith.addf %26, %29 : vector<1x512xf32>
      %31 = math.rsqrt %30 : vector<1x512xf32>
      %32 = vector.broadcast %31 : vector<1x512xf32> to vector<2x512xf32>
      %33 = arith.mulf %28, %32 : vector<2x512xf32>
      %cst_19 = arith.constant 0.000000e+00 : f32
      %34 = vector.broadcast %cst_19 : f32 to vector<2x512xf32>
      %35 = arith.maximumf %33, %34 : vector<2x512xf32>
      %c0_20 = arith.constant 0 : index
      %c0_21 = arith.constant 0 : index
      %36 = vector.load %arg5[%c0_20, %c0_21] : memref<2x512xf32, #tpu.memory_space<vmem>>, vector<2x512xf32>
      tpu.vector_store %arg5[%c0_20, %c0_21], %35 {strides = array<i32>} : memref<2x512xf32, #tpu.memory_space<vmem>>, vector<2x512xf32>,
    } else {
    }
    return
  }
  func.func @transform_0(%arg0: i32, %arg1: i32) -> (i32, i32) {
    %c0_i32 = arith.constant 0 : i32
    %c0_i32_0 = arith.constant 0 : i32
    return %c0_i32, %arg1 : i32, i32
  }
  func.func @transform_1(%arg0: i32, %arg1: i32) -> (i32, i32) {
    %c0_i32 = arith.constant 0 : i32
    return %arg1, %arg0 : i32, i32
  }
  func.func @transform_2(%arg0: i32, %arg1: i32) -> (i32, i32) {
    %c0_i32 = arith.constant 0 : i32
    %c0_i32_0 = arith.constant 0 : i32
    return %c0_i32, %arg0 : i32, i32
  }
  func.func @transform_3(%arg0: i32, %arg1: i32) -> (i32, i32) {
    %c0_i32 = arith.constant 0 : i32
    %c0_i32_0 = arith.constant 0 : i32
    return %c0_i32, %arg0 : i32, i32
  }
}

</mosaic_0001>

<llo_original>
// kernel: tpu_custom_call.1
$region0: #{tpu_custom_call.1}
  #allocation0 [shape = 'u32[]', space=smem, size = 0x4, offset = 0x4, fixed_abs, tag = 'smem constant byte address 0x4 - core index']
  #allocation1 [shape = 'u32[144,128]{1,0:T(1,128)}', space=vmem, size = 0x12000, scoped, tag = 'internal scratch']
  %s0 = inlined_call_operand.hbm [shape: f32[2,62], index: 0, kind: input, shape index: {}]
  %s1 = inlined_call_operand.hbm [shape: f32[62,1024], index: 1, kind: input, shape index: {}]
  %s2 = inlined_call_operand.hbm [shape: f32[1,1024], index: 2, kind: input, shape index: {}]
  %s3 = inlined_call_operand.hbm [shape: f32[2,1024], index: 3, kind: output, shape index: {}]
  %s4 = sld [smem:[#allocation0]]
  $region65: #{tpu_custom_call.1} parent=0
    _
  %s6 = ssub.s32 1, %s4
  %s7 = scalar_select 0, %s6, %s4
  $region1: #{tpu_custom_call.1} parent=0
    #allocation2 [shape = 'u8[1024]{0}', space=vmem, size = 0x400, scoped, tag = 'input window, operand 0, single buffered']
    #allocation3 [shape = 's32[2]{0}', space=sflag, size = 0x8, scoped, tag = 'scoped memory for tpu_custom_call.1']
    #allocation4 [shape = 's32[2]{0}', space=sflag, size = 0x8, scoped, tag = 'scoped memory for tpu_custom_call.1']
    #allocation5 [shape = 'u8[262144]{0}', space=vmem, size = 0x40000, scoped, tag = 'input window, operand 1']
    #allocation6 [shape = 's32[2]{0}', space=sflag, size = 0x8, scoped, tag = 'scoped memory for tpu_custom_call.1']
    #allocation7 [shape = 'u8[4096]{0}', space=vmem, size = 0x1000, scoped, tag = 'input window, operand 2']
    #allocation8 [shape = 'u8[8192]{0}', space=vmem, size = 0x2000, scoped, tag = 'output window, operand 0']
    %8 = vsyncpa [#allocation3], 0
    %9 = vsyncpa [#allocation6], 0
    %s10 = scalar_lea.sflag [#allocation6], 1
    %11 = vsyncpa %s10, 0
    %12 = vsyncpa [#allocation4], 0
    %s13 = scalar_lea.sflag [#allocation4], 1
    %14 = vsyncpa %s13, 0
    loop: start=0, step=1, limit=4
    $region2: #{tpu_custom_call.1} parent=1 // loop_pre_header
      _
    $region3: #{tpu_custom_call.1} parent=1 // loop_header
      %s16 = sphi 0, %s20
      %p17 = scmp.ge.s32.totalorder %s16, 4
      %s23 = sphi 0, %s35
      %s24 = sphi 0, %s31
      %s25 = sphi 0, %s23
      %s26 = sphi 0, %s24
      %s27 = sphi 0, %s25
      %s28 = sphi 0, %s26
      %s38 = sphi 0, %s40
      %s41 = sphi 0, %s38
      %s42 = sphi 0, %s41
      %s58 = sphi 0, %s42
      %s66 = sphi 0, %s68
      %s69 = sphi 0, %s66
      %s70 = sphi 0, %s69
      %s86 = sphi 0, %s70
      %s92 = sphi 0, %s94
      %s95 = sphi 0, %s92
      %s96 = sphi 0, %s95
      %s112 = sphi 0, %s96
      %s118 = sphi 0, %s120
      %s121 = sphi 0, %s118
      %s122 = sphi 0, %s121
      %s138 = sphi 0, %s122
    $region4: #{tpu_custom_call.1} parent=1 // loop_header_branch
      %19 = sbr.rel (%p17) target = $region8
    $region5: #{tpu_custom_call.1} parent=1 // loop_body
      %s21 = ssub.s32 %s16, 1
      %s22 = ssub.s32 %s16, 2
      %s29 = sadd.s32 1, %s24
      %p30 = scmp.ge.s32.totalorder %s29, 1
      %s31 = scalar_select %p30, 0, %s29
      %s32 = sadd.s32 1, %s23
      %s33 = scalar_select %p30, %s32, %s23
      %p34 = scmp.ge.s32.totalorder %s33, 2
      %s35 = scalar_select %p34, 0, %s33
      %s36 = ssub.s32 %s24, %s31
      %p37 = scmp.eq.s32.totalorder %s36, 0
      %s39 = sadd.s32 %s38, 1
      %s40 = scalar_select %p37, %s38, %s39
      %p43 = pneg %p37
      %p44 = scmp.eq.s32.totalorder %s16, 1
      %p45 = por %p43, %p44
      %p46 = scmp.ne.s32.totalorder %s38, %s41
      %p47 = scmp.eq.s32.totalorder %s16, 0
      %p48 = por %p46, %p47
      %p49 = scmp.ne.s32.totalorder %s38, %s41
      %p50 = scmp.eq.s32.totalorder %s21, 1
      %p51 = por %p49, %p50
      %p52 = scmp.ne.s32.totalorder %s41, %s42
      %p53 = scmp.eq.s32.totalorder %s21, 0
      %p54 = por %p52, %p53
      %p55 = scmp.ne.s32.totalorder %s41, %s42
      %p56 = scmp.eq.s32.totalorder %s22, 1
      %p57 = por %p55, %p56
      %p59 = scmp.ne.s32.totalorder %s42, %s58
      %p60 = scmp.eq.s32.totalorder %s22, 0
      %p61 = por %p59, %p60
      %s62 = ssub.s32 %s24, %s31
      %s63 = ssub.s32 %s23, %s35
      %s64 = sor.u32 %s62, %s63
      %p65 = scmp.eq.s32.totalorder %s64, 0
      %s67 = sadd.s32 %s66, 1
      %s68 = scalar_select %p65, %s66, %s67
      %p71 = pneg %p65
      %p72 = scmp.eq.s32.totalorder %s16, 1
      %p73 = por %p71, %p72
      %p74 = scmp.ne.s32.totalorder %s66, %s69
      %p75 = scmp.eq.s32.totalorder %s16, 0
      %p76 = por %p74, %p75
      %p77 = scmp.ne.s32.totalorder %s66, %s69
      %p78 = scmp.eq.s32.totalorder %s21, 1
      %p79 = por %p77, %p78
      %p80 = scmp.ne.s32.totalorder %s69, %s70
      %p81 = scmp.eq.s32.totalorder %s21, 0
      %p82 = por %p80, %p81
      %p83 = scmp.ne.s32.totalorder %s69, %s70
      %p84 = scmp.eq.s32.totalorder %s22, 1
      %p85 = por %p83, %p84
      %p87 = scmp.ne.s32.totalorder %s70, %s86
      %p88 = scmp.eq.s32.totalorder %s22, 0
      %p89 = por %p87, %p88
      %s90 = ssub.s32 %s23, %s35
      %p91 = scmp.eq.s32.totalorder %s90, 0
      %s93 = sadd.s32 %s92, 1
      %s94 = scalar_select %p91, %s92, %s93
      %p97 = pneg %p91
      %p98 = scmp.eq.s32.totalorder %s16, 1
      %p99 = por %p97, %p98
      %p100 = scmp.ne.s32.totalorder %s92, %s95
      %p101 = scmp.eq.s32.totalorder %s16, 0
      %p102 = por %p100, %p101
      %p103 = scmp.ne.s32.totalorder %s92, %s95
      %p104 = scmp.eq.s32.totalorder %s21, 1
      %p105 = por %p103, %p104
      %p106 = scmp.ne.s32.totalorder %s95, %s96
      %p107 = scmp.eq.s32.totalorder %s21, 0
      %p108 = por %p106, %p107
      %p109 = scmp.ne.s32.totalorder %s95, %s96
      %p110 = scmp.eq.s32.totalorder %s22, 1
      %p111 = por %p109, %p110
      %p113 = scmp.ne.s32.totalorder %s96, %s112
      %p114 = scmp.eq.s32.totalorder %s22, 0
      %p115 = por %p113, %p114
      %s116 = ssub.s32 %s23, %s35
      %p117 = scmp.eq.s32.totalorder %s116, 0
      %s119 = sadd.s32 %s118, 1
      %s120 = scalar_select %p117, %s118, %s119
      %p123 = pneg %p117
      %p124 = scmp.eq.s32.totalorder %s16, 1
      %p125 = por %p123, %p124
      %p126 = scmp.ne.s32.totalorder %s118, %s121
      %p127 = scmp.eq.s32.totalorder %s16, 0
      %p128 = por %p126, %p127
      %p129 = scmp.ne.s32.totalorder %s118, %s121
      %p130 = scmp.eq.s32.totalorder %s21, 1
      %p131 = por %p129, %p130
      %p132 = scmp.ne.s32.totalorder %s121, %s122
      %p133 = scmp.eq.s32.totalorder %s21, 0
      %p134 = por %p132, %p133
      %p135 = scmp.ne.s32.totalorder %s121, %s122
      %p136 = scmp.eq.s32.totalorder %s22, 1
      %p137 = por %p135, %p136
      %p139 = scmp.ne.s32.totalorder %s122, %s138
      %p140 = scmp.eq.s32.totalorder %s22, 0
      %p141 = por %p139, %p140
      %p142 = scmp.le.s32.totalorder 1, %s16
      %p143 = scmp.lt.s32.totalorder %s16, 3
      %p144 = pnand %p142, %p143
      %p145 = pneg %p144
      // Predicated region
      $region9: #{tpu_custom_call.1} parent=5 // pred_check
        _
      $region10: #{tpu_custom_call.1} parent=5 // pred_check_branch
        %147 = sbr.rel (%p144) target = $region12
      $region11: #{tpu_custom_call.1} parent=5 // pred_region
        %s148 = ssub.s32 %s16, 1
        // Predicated region
        $region13: #{tpu_custom_call.1} parent=11 // pred_check
          %p149 = pneg %p54
        $region14: #{tpu_custom_call.1} parent=11 // pred_check_branch
          %151 = sbr.rel (%p149) target = $region16
        $region15: #{tpu_custom_call.1} parent=11 // pred_region
          %s153 = ssub.s32 32, 32
          %154 = vsyncadd [#allocation3], %s153
          %s155 = smul.addr %s26, 32
          %s156 = scalar_lea.hbm %s0, %s155
          %s158 = sshll.u32 [#allocation2], 4
          %s159 = int_to_ptr.vmem [resolvable:$true] %s158
          %161 = dma.hbm_to_vmem [thread:$0]  %s156, 32, %s159, [#allocation3]
        $region16: #{tpu_custom_call.1} parent=11 // pred_fallthru
          _
      $region12: #{tpu_custom_call.1} parent=5 // pred_fallthru
        _
      %p162 = scmp.lt.s32.totalorder %s16, 2
      // Predicated region
      $region17: #{tpu_custom_call.1} parent=5 // pred_check
        %p163 = pneg %p162
      $region18: #{tpu_custom_call.1} parent=5 // pred_check_branch
        %165 = sbr.rel (%p163) target = $region20
      $region19: #{tpu_custom_call.1} parent=5 // pred_region
        // Predicated region
        $region21: #{tpu_custom_call.1} parent=19 // pred_check
          %p166 = pneg %p76
        $region22: #{tpu_custom_call.1} parent=19 // pred_check_branch
          %168 = sbr.rel (%p166) target = $region24
        $region23: #{tpu_custom_call.1} parent=19 // pred_region
          %s169 = sand.u32 %s16, 1
          %s170 = scalar_lea.sflag [#allocation6], %s169
          %s171 = sand.u32 %s66, 1
          %s172 = smul.addr %s171, 256
          %s173 = scalar_lea.vmem [#allocation5], %s172
          %s174 = smul.u32 8, %s24
          %s175 = smul.u32 4, %s23
          %s177 = ssub.s32 4096, 4096
          %178 = vsyncadd %s170, %s177
          %s179 = smul.addr %s174, 8
          %s180 = sadd.s32 %s175, %s179
          %s181 = smul.addr %s180, 128
          %s182 = scalar_lea.hbm %s1, %s181
          %s183 = sshll.u32 %s173, 4
          %s184 = int_to_ptr.vmem [resolvable:$true] %s183
          %189 = dma.hbm_to_vmem [thread:$0]  %s182, 4096, %s184, %s170, 1024, 512, 32
        $region24: #{tpu_custom_call.1} parent=19 // pred_fallthru
          _
        // Predicated region
        $region25: #{tpu_custom_call.1} parent=19 // pred_check
          %p190 = pneg %p102
        $region26: #{tpu_custom_call.1} parent=19 // pred_check_branch
          %192 = sbr.rel (%p190) target = $region28
        $region27: #{tpu_custom_call.1} parent=19 // pred_region
          %s193 = sand.u32 %s16, 1
          %s194 = scalar_lea.sflag [#allocation6], %s193
          %s195 = sand.u32 %s92, 1
          %s196 = smul.addr %s195, 4
          %s197 = scalar_lea.vmem [#allocation7], %s196
          %s198 = smul.u32 4, %s23
          %s200 = ssub.s32 64, 64
          %201 = vsyncadd %s194, %s200
          %s202 = smul.addr %s198, 16
          %s203 = scalar_lea.hbm %s2, %s202
          %s205 = sshll.u32 %s197, 4
          %s206 = int_to_ptr.vmem [resolvable:$true] %s205
          %208 = dma.hbm_to_vmem [thread:$0]  %s203, 64, %s206, %s194
        $region28: #{tpu_custom_call.1} parent=19 // pred_fallthru
          _
      $region20: #{tpu_custom_call.1} parent=5 // pred_fallthru
        _
      %p209 = scmp.le.s32.totalorder 1, %s16
      %p210 = scmp.lt.s32.totalorder %s16, 3
      %p211 = pnand %p209, %p210
      %p212 = pneg %p211
      // Predicated region
      $region29: #{tpu_custom_call.1} parent=5 // pred_check
        _
      $region30: #{tpu_custom_call.1} parent=5 // pred_check_branch
        %214 = sbr.rel (%p211) target = $region32
      $region31: #{tpu_custom_call.1} parent=5 // pred_region
        %s215 = ssub.s32 %s16, 1
        // Predicated region
        $region33: #{tpu_custom_call.1} parent=31 // pred_check
          %p216 = pneg %p54
        $region34: #{tpu_custom_call.1} parent=31 // pred_check_branch
          %218 = sbr.rel (%p216) target = $region36
        $region35: #{tpu_custom_call.1} parent=31 // pred_region
          %219 = dma.done [#allocation3], 32
        $region36: #{tpu_custom_call.1} parent=31 // pred_fallthru
          _
        %s220 = sand.u32 %s21, 1
        %s221 = scalar_lea.sflag [#allocation6], %s220
        %s222 = sand.u32 %s69, 1
        %s223 = smul.addr %s222, 256
        %s224 = scalar_lea.vmem [#allocation5], %s223
        // Predicated region
        $region37: #{tpu_custom_call.1} parent=31 // pred_check
          %p225 = pneg %p82
        $region38: #{tpu_custom_call.1} parent=31 // pred_check_branch
          %227 = sbr.rel (%p225) target = $region40
        $region39: #{tpu_custom_call.1} parent=31 // pred_region
          %228 = dma.done %s221, 4096
        $region40: #{tpu_custom_call.1} parent=31 // pred_fallthru
          _
        %s229 = sand.u32 %s21, 1
        %s230 = scalar_lea.sflag [#allocation6], %s229
        %s231 = sand.u32 %s95, 1
        %s232 = smul.addr %s231, 4
        %s233 = scalar_lea.vmem [#allocation7], %s232
        // Predicated region
        $region41: #{tpu_custom_call.1} parent=31 // pred_check
          %p234 = pneg %p108
        $region42: #{tpu_custom_call.1} parent=31 // pred_check_branch
          %236 = sbr.rel (%p234) target = $region44
        $region43: #{tpu_custom_call.1} parent=31 // pred_region
          %237 = dma.done %s230, 64
        $region44: #{tpu_custom_call.1} parent=31 // pred_fallthru
          _
        %p238 = pneg %p54
        %p239 = pneg %p51
        %s240 = sand.u32 %s21, 1
        %s241 = scalar_lea.sflag [#allocation6], %s240
        %s242 = sand.u32 %s69, 1
        %s243 = smul.addr %s242, 256
        %s244 = scalar_lea.vmem [#allocation5], %s243
        %p245 = pneg %p82
        %p246 = pneg %p79
        %s247 = sand.u32 %s21, 1
        %s248 = scalar_lea.sflag [#allocation6], %s247
        %s249 = sand.u32 %s95, 1
        %s250 = smul.addr %s249, 4
        %s251 = scalar_lea.vmem [#allocation7], %s250
        %p252 = pneg %p108
        %p253 = pneg %p105
        %p254 = pneg %p134
        %p255 = pneg %p131
        %s256 = sand.u32 %s121, 1
        %s257 = scalar_lea.sflag [#allocation4], %s256
        %s258 = sand.u32 %s121, 1
        %s259 = smul.addr %s258, 8
        %s260 = scalar_lea.vmem [#allocation8], %s259
        %s261 = smul.u32 8, %s26
        %s262 = smul.u32 4, %s25
        %s263 = smul.u32 4, %s25
        %s264 = smul.u32 4, %s25
        %p265 = scmp.eq.s32.totalorder %s26, 0
        // Predicated region
        $region45: #{tpu_custom_call.1} parent=31 // pred_check
          %p266 = pneg %p265
        $region46: #{tpu_custom_call.1} parent=31 // pred_check_branch
          %268 = sbr.rel (%p266) target = $region48
        $region47: #{tpu_custom_call.1} parent=31 // pred_region
          %269 = vst [vmem:[%s260] sm:$0xff] 0.0
        $region48: #{tpu_custom_call.1} parent=31 // pred_fallthru
          _
        %v270 = vld [vmem:[%s260] sm:$0xff]
        %v271 = vld [vmem:[#allocation2] sm:$0x3]
        %v272 = vld [vmem:[%s224] sm:$0xff]
        %v273 = vld [vmem:[%s224 + $0x8] sm:$0xff]
        %v274 = vld [vmem:[%s224 + $0x10] sm:$0xff]
        %v275 = vld [vmem:[%s224 + $0x18] sm:$0xff]
        %v276 = vld [vmem:[%s224 + $0x20] sm:$0xff]
        %v277 = vld [vmem:[%s224 + $0x28] sm:$0xff]
        %v278 = vld [vmem:[%s224 + $0x30] sm:$0xff]
        %v279 = vld [vmem:[%s224 + $0x38] sm:$0xff]
        %v280 = vld [vmem:[%s224 + $0x40] sm:$0xff]
        %v281 = vld [vmem:[%s224 + $0x48] sm:$0xff]
        %v282 = vld [vmem:[%s224 + $0x50] sm:$0xff]
        %v283 = vld [vmem:[%s224 + $0x58] sm:$0xff]
        %v284 = vld [vmem:[%s224 + $0x60] sm:$0xff]
        %v285 = vld [vmem:[%s224 + $0x68] sm:$0xff]
        %v286 = vld [vmem:[%s224 + $0x70] sm:$0xff]
        %v287 = vld [vmem:[%s224 + $0x78] sm:$0xff]
        %v288 = vld [vmem:[%s224 + $0x80] sm:$0xff]
        %v289 = vld [vmem:[%s224 + $0x88] sm:$0xff]
        %v290 = vld [vmem:[%s224 + $0x90] sm:$0xff]
        %v291 = vld [vmem:[%s224 + $0x98] sm:$0xff]
        %v292 = vld [vmem:[%s224 + $0xa0] sm:$0xff]
        %v293 = vld [vmem:[%s224 + $0xa8] sm:$0xff]
        %v294 = vld [vmem:[%s224 + $0xb0] sm:$0xff]
        %v295 = vld [vmem:[%s224 + $0xb8] sm:$0xff]
        %v296 = vld [vmem:[%s224 + $0xc0] sm:$0xff]
        %v297 = vld [vmem:[%s224 + $0xc8] sm:$0xff]
        %v298 = vld [vmem:[%s224 + $0xd0] sm:$0xff]
        %v299 = vld [vmem:[%s224 + $0xd8] sm:$0xff]
        %v300 = vld [vmem:[%s224 + $0xe0] sm:$0x3f]
        %v301 = vld [vmem:[%s224 + $0xe8] sm:$0x3f]
        %v302 = vld [vmem:[%s224 + $0xf0] sm:$0x3f]
        %v303 = vld [vmem:[%s224 + $0xf8] sm:$0x3f]
        %vm304 = vcmask 506880
        %v306 = vsel %vm304, %v271, 0
        %vm308 = vcmask 1045504
        %v310 = vsel %vm308, %v300, 0
        %v313 = vsel %vm308, %v301, 0
        %v316 = vsel %vm308, %v302, 0
        %v319 = vsel %vm308, %v303, 0
        %321 = vmatprep.subr.mxu0 %v273
        %322 = vmatpush1.msra.mxu0 %v272
        %323 = vmatprep.subr.mxu0 %v277
        %324 = vmatpush1.msra.mxu0 %v276
        %325 = vmatprep.subr.mxu0 %v281
        %326 = vmatpush1.msra.mxu0 %v280
        %327 = vmatprep.subr.mxu0 %v285
        %328 = vmatpush1.msra.mxu0 %v284
        %329 = vmatprep.subr.mxu0 %v289
        %330 = vmatpush1.msra.mxu0 %v288
        %331 = vmatprep.subr.mxu0 %v293
        %332 = vmatpush1.msra.mxu0 %v292
        %333 = vmatprep.subr.mxu0 %v297
        %334 = vmatpush1.msra.mxu0 %v296
        %335 = vmatprep.subr.mxu0 %v313
        %336 = vmatpush1.msra.mxu0 %v310
        %337 = vmatprep.subr.mxu0 0.0
        %338 = vmatpush1.msra.mxu0 0.0
        %339 = vmatprep.subr.mxu0 0.0
        %340 = vmatpush1.msra.mxu0 0.0
        %341 = vmatprep.subr.mxu0 0.0
        %342 = vmatpush1.msra.mxu0 0.0
        %343 = vmatprep.subr.mxu0 0.0
        %344 = vmatpush1.msra.mxu0 0.0
        %345 = vmatprep.subr.mxu0 0.0
        %346 = vmatpush1.msra.mxu0 0.0
        %347 = vmatprep.subr.mxu0 0.0
        %348 = vmatpush1.msra.mxu0 0.0
        %349 = vmatprep.subr.mxu0 0.0
        %350 = vmatpush1.msra.mxu0 0.0
        %351 = vmatprep.subr.mxu0 0.0
        %352 = vmatpush1.msra.mxu0 0.0
        %353 = vmatprep.subr.mxu0 0.0
        %354 = vmatpush1.msra.mxu0 0.0
        %355 = vmatprep.subr.mxu0 0.0
        %356 = vmatpush1.msra.mxu0 0.0
        %357 = vmatprep.subr.mxu0 0.0
        %358 = vmatpush1.msra.mxu0 0.0
        %359 = vmatprep.subr.mxu0 0.0
        %360 = vmatpush1.msra.mxu0 0.0
        %361 = vmatprep.subr.mxu0 0.0
        %362 = vmatpush1.msra.mxu0 0.0
        %363 = vmatprep.subr.mxu0 0.0
        %364 = vmatpush1.msra.mxu0 0.0
        %365 = vmatprep.subr.mxu0 0.0
        %366 = vmatpush1.msra.mxu0 0.0
        %367 = vmatprep.subr.mxu0 0.0
        %368 = vmatpush1.msra.mxu0 0.0
        %369 = vmatprep.subr.mxu0 0.0
        %370 = vmatpush1.msra.mxu0 0.0
        %371 = vmatprep.subr.mxu0 0.0
        %372 = vmatpush1.msra.mxu0 0.0
        %373 = vmatprep.subr.mxu0 0.0
        %374 = vmatpush1.msra.mxu0 0.0
        %375 = vmatprep.subr.mxu0 0.0
        %376 = vmatpush1.msra.mxu0 0.0
        %377 = vmatprep.subr.mxu0 0.0
        %378 = vmatpush1.msra.mxu0 0.0
        %379 = vmatprep.subr.mxu0 0.0
        %380 = vmatpush1.msra.mxu0 0.0
        %381 = vmatprep.subr.mxu0 0.0
        %382 = vmatpush1.msra.mxu0 0.0
        %383 = vmatprep.subr.mxu0 0.0
        %384 = vmatpush1.msra.mxu0 0.0
        %385 = vmatprep.mubr.f32.mxu0 0.0
        %386 = vmatmul.mubr.f32.gmra.mrb[0].mxu0 %v306
        %v387 = vpop.f32.mrb[0].mxu0
        %v388 = vadd.f32 0.0, %v387
        %v389 = vpop.f32.mrb[0].mxu0
        %v390 = vadd.f32 0.0, %v389
        %391 = vdwg.mxu0
        %392 = vmatprep.subr.mxu0 %v275
        %393 = vmatpush1.msra.mxu0 %v274
        %394 = vmatprep.subr.mxu0 %v279
        %395 = vmatpush1.msra.mxu0 %v278
        %396 = vmatprep.subr.mxu0 %v283
        %397 = vmatpush1.msra.mxu0 %v282
        %398 = vmatprep.subr.mxu0 %v287
        %399 = vmatpush1.msra.mxu0 %v286
        %400 = vmatprep.subr.mxu0 %v291
        %401 = vmatpush1.msra.mxu0 %v290
        %402 = vmatprep.subr.mxu0 %v295
        %403 = vmatpush1.msra.mxu0 %v294
        %404 = vmatprep.subr.mxu0 %v299
        %405 = vmatpush1.msra.mxu0 %v298
        %406 = vmatprep.subr.mxu0 %v319
        %407 = vmatpush1.msra.mxu0 %v316
        %408 = vmatprep.subr.mxu0 0.0
        %409 = vmatpush1.msra.mxu0 0.0
        %410 = vmatprep.subr.mxu0 0.0
        %411 = vmatpush1.msra.mxu0 0.0
        %412 = vmatprep.subr.mxu0 0.0
        %413 = vmatpush1.msra.mxu0 0.0
        %414 = vmatprep.subr.mxu0 0.0
        %415 = vmatpush1.msra.mxu0 0.0
        %416 = vmatprep.subr.mxu0 0.0
        %417 = vmatpush1.msra.mxu0 0.0
        %418 = vmatprep.subr.mxu0 0.0
        %419 = vmatpush1.msra.mxu0 0.0
        %420 = vmatprep.subr.mxu0 0.0
        %421 = vmatpush1.msra.mxu0 0.0
        %422 = vmatprep.subr.mxu0 0.0
        %423 = vmatpush1.msra.mxu0 0.0
        %424 = vmatprep.subr.mxu0 0.0
        %425 = vmatpush1.msra.mxu0 0.0
        %426 = vmatprep.subr.mxu0 0.0
        %427 = vmatpush1.msra.mxu0 0.0
        %428 = vmatprep.subr.mxu0 0.0
        %429 = vmatpush1.msra.mxu0 0.0
        %430 = vmatprep.subr.mxu0 0.0
        %431 = vmatpush1.msra.mxu0 0.0
        %432 = vmatprep.subr.mxu0 0.0
        %433 = vmatpush1.msra.mxu0 0.0
        %434 = vmatprep.subr.mxu0 0.0
        %435 = vmatpush1.msra.mxu0 0.0
        %436 = vmatprep.subr.mxu0 0.0
        %437 = vmatpush1.msra.mxu0 0.0
        %438 = vmatprep.subr.mxu0 0.0
        %439 = vmatpush1.msra.mxu0 0.0
        %440 = vmatprep.subr.mxu0 0.0
        %441 = vmatpush1.msra.mxu0 0.0
        %442 = vmatprep.subr.mxu0 0.0
        %443 = vmatpush1.msra.mxu0 0.0
        %444 = vmatprep.subr.mxu0 0.0
        %445 = vmatpush1.msra.mxu0 0.0
        %446 = vmatprep.subr.mxu0 0.0
        %447 = vmatpush1.msra.mxu0 0.0
        %448 = vmatprep.subr.mxu0 0.0
        %449 = vmatpush1.msra.mxu0 0.0
        %450 = vmatprep.subr.mxu0 0.0
        %451 = vmatpush1.msra.mxu0 0.0
        %452 = vmatprep.subr.mxu0 0.0
        %453 = vmatpush1.msra.mxu0 0.0
        %454 = vmatprep.subr.mxu0 0.0
        %455 = vmatpush1.msra.mxu0 0.0
        %456 = vmatprep.mubr.f32.mxu0 0.0
        %457 = vmatmul.mubr.f32.gmra.mrb[0].mxu0 %v306
        %v458 = vpop.f32.mrb[0].mxu0
        %v459 = vadd.f32 0.0, %v458
        %v460 = vpop.f32.mrb[0].mxu0
        %v461 = vadd.f32 0.0, %v460
        %462 = vdwg.mxu0
        %v467 = vcombine.low %v388, %v390
        %v468 = vcombine.low %v459, %v461
        %v470 = vunpack.c.l.s4 1983009808
        %v471 = vunpack.c.0.s8 %v470
        %v472 = vlaneseq
        %v473 = vshrl.u32 %v472, 7
        %v474 = vsub.s32 %v471, %v473
        %v475 = vrot.slane %v467, %v474
        %v477 = vunpack.c.l.s4 1983009808
        %v478 = vunpack.c.0.s8 %v477
        %v479 = vlaneseq
        %v480 = vshrl.u32 %v479, 7
        %v481 = vsub.s32 %v478, %v480
        %v482 = vrot.slane %v468, %v481
        %v483 = vcombine.low %v475, %v482
        %v485 = vadd.f32 %v270, %v483
        %486 = vst [vmem:[%s260] sm:$0xff] %v485
        // Predicated region
        $region49: #{tpu_custom_call.1} parent=31 // pred_check
          %p487 = pneg %p265
        $region50: #{tpu_custom_call.1} parent=31 // pred_check_branch
          %489 = sbr.rel (%p487) target = $region52
        $region51: #{tpu_custom_call.1} parent=31 // pred_region
          %v490 = vld [vmem:[%s260] sm:$0xff]
          %v491 = vld [vmem:[%s233] sm:$0xf]
          %v493 = vlaneseq
          %v494 = vshrl.u32 %v493, 7
          %v495 = vsub.s32 0, %v494
          %v496 = vrot.slane %v491, %v495
          %v497 = vlaneseq
          %v498 = vshrl.u32 %v497, 7
          %v499 = vsub.s32 1, %v498
          %v500 = vrot.slane %v491, %v499
          %v501 = vlaneseq
          %v502 = vshrl.u32 %v501, 7
          %v503 = vsub.s32 2, %v502
          %v504 = vrot.slane %v491, %v503
          %v505 = vlaneseq
          %v506 = vshrl.u32 %v505, 7
          %v507 = vsub.s32 3, %v506
          %v508 = vrot.slane %v491, %v507
          %v509 = vcombine.low %v496, %v500
          %v510 = vcombine.low %v504, %v508
          %v512 = vunpack.c.l.s4 1983009808
          %v513 = vunpack.c.0.s8 %v512
          %v514 = vlaneseq
          %v515 = vshrl.u32 %v514, 7
          %v516 = vsub.s32 %v513, %v515
          %v517 = vrot.slane %v509, %v516
          %v519 = vunpack.c.l.s4 1983009808
          %v520 = vunpack.c.0.s8 %v519
          %v521 = vlaneseq
          %v522 = vshrl.u32 %v521, 7
          %v523 = vsub.s32 %v520, %v522
          %v524 = vrot.slane %v510, %v523
          %v525 = vcombine.low %v517, %v524
          %v527 = vadd.f32 %v490, %v525
          %v529 = vcombine.high %v527, %v527
          %v531 = vunpack.c.l.s4 1983009808
          %v532 = vunpack.c.0.s8 %v531
          %v533 = vlaneseq
          %v534 = vshrl.u32 %v533, 7
          %v535 = vsub.s32 %v532, %v534
          %v536 = vrot.slane %v527, %v535
          %v538 = vunpack.c.l.s4 1983009808
          %v539 = vunpack.c.0.s8 %v538
          %v540 = vlaneseq
          %v541 = vshrl.u32 %v540, 7
          %v542 = vsub.s32 %v539, %v541
          %v543 = vrot.slane %v529, %v542
          %v544 = vcombine.high %v536, %v536
          %v545 = vcombine.high %v543, %v543
          %vm550 = vcmask 1041408
          %v551 = vsel %vm550, %v536, 0.0
          %v552 = vrot.slane %v551, 4
          %v553 = vadd.f32 %v551, %v552
          %v554 = vrot.slane %v553, 2
          %v555 = vadd.f32 %v553, %v554
          %v556 = vrot.slane %v555, 1
          %v557 = vadd.f32 %v555, %v556
          %v558 = vsel %vm550, %v544, 0.0
          %v559 = vrot.slane %v558, 4
          %v560 = vadd.f32 %v558, %v559
          %v561 = vrot.slane %v560, 2
          %v562 = vadd.f32 %v560, %v561
          %v563 = vrot.slane %v562, 1
          %v564 = vadd.f32 %v562, %v563
          %v565 = vsel %vm550, %v543, 0.0
          %v566 = vrot.slane %v565, 4
          %v567 = vadd.f32 %v565, %v566
          %v568 = vrot.slane %v567, 2
          %v569 = vadd.f32 %v567, %v568
          %v570 = vrot.slane %v569, 1
          %v571 = vadd.f32 %v569, %v570
          %v572 = vsel %vm550, %v545, 0.0
          %v573 = vrot.slane %v572, 4
          %v574 = vadd.f32 %v572, %v573
          %v575 = vrot.slane %v574, 2
          %v576 = vadd.f32 %v574, %v575
          %v577 = vrot.slane %v576, 1
          %v578 = vadd.f32 %v576, %v577
          %v579 = vrcp.pop 2.0
          %v580 = vmul.f32 %v557, %v579
          %v581 = vmul.f32 %v564, %v579
          %v582 = vmul.f32 %v571, %v579
          %v583 = vmul.f32 %v578, %v579
          %v588 = vcombine.low %v580, %v581
          %v589 = vcombine.low %v582, %v583
          %v591 = vunpack.c.l.s4 1983009808
          %v592 = vunpack.c.0.s8 %v591
          %v593 = vlaneseq
          %v594 = vshrl.u32 %v593, 7
          %v595 = vsub.s32 %v592, %v594
          %v596 = vrot.slane %v588, %v595
          %v598 = vunpack.c.l.s4 1983009808
          %v599 = vunpack.c.0.s8 %v598
          %v600 = vlaneseq
          %v601 = vshrl.u32 %v600, 7
          %v602 = vsub.s32 %v599, %v601
          %v603 = vrot.slane %v589, %v602
          %v604 = vcombine.low %v596, %v603
          %v606 = vsub.f32 %v527, %v604
          %v607 = vmul.f32 %v606, %v606
          %v609 = vcombine.high %v607, %v607
          %v611 = vunpack.c.l.s4 1983009808
          %v612 = vunpack.c.0.s8 %v611
          %v613 = vlaneseq
          %v614 = vshrl.u32 %v613, 7
          %v615 = vsub.s32 %v612, %v614
          %v616 = vrot.slane %v607, %v615
          %v618 = vunpack.c.l.s4 1983009808
          %v619 = vunpack.c.0.s8 %v618
          %v620 = vlaneseq
          %v621 = vshrl.u32 %v620, 7
          %v622 = vsub.s32 %v619, %v621
          %v623 = vrot.slane %v609, %v622
          %v624 = vcombine.high %v616, %v616
          %v625 = vcombine.high %v623, %v623
          %v630 = vsel %vm550, %v616, 0.0
          %v631 = vrot.slane %v630, 4
          %v632 = vadd.f32 %v630, %v631
          %v633 = vrot.slane %v632, 2
          %v634 = vadd.f32 %v632, %v633
          %v635 = vrot.slane %v634, 1
          %v636 = vadd.f32 %v634, %v635
          %v637 = vsel %vm550, %v624, 0.0
          %v638 = vrot.slane %v637, 4
          %v639 = vadd.f32 %v637, %v638
          %v640 = vrot.slane %v639, 2
          %v641 = vadd.f32 %v639, %v640
          %v642 = vrot.slane %v641, 1
          %v643 = vadd.f32 %v641, %v642
          %v644 = vsel %vm550, %v623, 0.0
          %v645 = vrot.slane %v644, 4
          %v646 = vadd.f32 %v644, %v645
          %v647 = vrot.slane %v646, 2
          %v648 = vadd.f32 %v646, %v647
          %v649 = vrot.slane %v648, 1
          %v650 = vadd.f32 %v648, %v649
          %v651 = vsel %vm550, %v625, 0.0
          %v652 = vrot.slane %v651, 4
          %v653 = vadd.f32 %v651, %v652
          %v654 = vrot.slane %v653, 2
          %v655 = vadd.f32 %v653, %v654
          %v656 = vrot.slane %v655, 1
          %v657 = vadd.f32 %v655, %v656
          %v658 = vmul.f32 %v636, %v579
          %v659 = vmul.f32 %v643, %v579
          %v660 = vmul.f32 %v650, %v579
          %v661 = vmul.f32 %v657, %v579
          %v662 = vadd.f32 %v658, 1e-05
          %v663 = vadd.f32 %v659, 1e-05
          %v664 = vadd.f32 %v660, 1e-05
          %v665 = vadd.f32 %v661, 1e-05
          %v666 = vrsqrt.pop %v662
          %v667 = vrsqrt.pop %v663
          %v668 = vrsqrt.pop %v664
          %v669 = vrsqrt.pop %v665
          %v674 = vcombine.low %v666, %v667
          %v675 = vcombine.low %v668, %v669
          %v677 = vunpack.c.l.s4 1983009808
          %v678 = vunpack.c.0.s8 %v677
          %v679 = vlaneseq
          %v680 = vshrl.u32 %v679, 7
          %v681 = vsub.s32 %v678, %v680
          %v682 = vrot.slane %v674, %v681
          %v684 = vunpack.c.l.s4 1983009808
          %v685 = vunpack.c.0.s8 %v684
          %v686 = vlaneseq
          %v687 = vshrl.u32 %v686, 7
          %v688 = vsub.s32 %v685, %v687
          %v689 = vrot.slane %v675, %v688
          %v690 = vcombine.low %v682, %v689
          %v692 = vmul.f32 %v606, %v690
          %v693 = vmax.f32 %v692, 0.0
          %694 = vst [vmem:[%s260] sm:$0xff] %v693
        $region52: #{tpu_custom_call.1} parent=31 // pred_fallthru
          _
        %s695 = sand.u32 %s121, 1
        %s696 = scalar_lea.sflag [#allocation4], %s695
        %s697 = sand.u32 %s121, 1
        %s698 = smul.addr %s697, 8
        %s699 = scalar_lea.vmem [#allocation8], %s698
        // Predicated region
        $region53: #{tpu_custom_call.1} parent=31 // pred_check
          %p700 = pneg %p131
        $region54: #{tpu_custom_call.1} parent=31 // pred_check_branch
          %702 = sbr.rel (%p700) target = $region56
        $region55: #{tpu_custom_call.1} parent=31 // pred_region
          %s703 = smul.u32 4, %s25
          %s705 = ssub.s32 128, 128
          %706 = vsyncadd %s696, %s705
          %s707 = smul.addr %s703, 32
          %s708 = scalar_lea.hbm %s3, %s707
          %s710 = sshll.u32 %s699, 4
          %s711 = int_to_ptr.vmem [resolvable:$true] %s710
          %713 = dma.vmem_to_hbm [thread:$0]  %s711, 128, %s708, %s696
        $region56: #{tpu_custom_call.1} parent=31 // pred_fallthru
          _
      $region32: #{tpu_custom_call.1} parent=5 // pred_fallthru
        _
      %p714 = scmp.le.s32.totalorder 2, %s16
      // Predicated region
      $region57: #{tpu_custom_call.1} parent=5 // pred_check
        %p715 = pneg %p714
      $region58: #{tpu_custom_call.1} parent=5 // pred_check_branch
        %717 = sbr.rel (%p715) target = $region60
      $region59: #{tpu_custom_call.1} parent=5 // pred_region
        %s718 = ssub.s32 %s16, 2
        // Predicated region
        $region61: #{tpu_custom_call.1} parent=59 // pred_check
          %p719 = pneg %p137
        $region62: #{tpu_custom_call.1} parent=59 // pred_check_branch
          %721 = sbr.rel (%p719) target = $region64
        $region63: #{tpu_custom_call.1} parent=59 // pred_region
          %s722 = sand.u32 %s122, 1
          %s723 = scalar_lea.sflag [#allocation4], %s722
          %s724 = sand.u32 %s122, 1
          %s725 = smul.addr %s724, 8
          %s726 = scalar_lea.vmem [#allocation8], %s725
          %727 = dma.done %s723, 128
        $region64: #{tpu_custom_call.1} parent=59 // pred_fallthru
          _
      $region60: #{tpu_custom_call.1} parent=5 // pred_fallthru
        _
    $region6: #{tpu_custom_call.1} parent=1 // loop_footer
      %s20 = sadd.s32 1, %s16
    $region7: #{tpu_custom_call.1} parent=1 // loop_footer_branch
      %15 = sbr.rel target = $region3
    $region8: #{tpu_custom_call.1} parent=1 // loop_exit
      _
    %728 = vsyncpa [#allocation3], 1
    %s729 = scalar_lea.sflag [#allocation3], 1
    %730 = vsyncpa %s729, 1
    %731 = vsyncpa [#allocation6], 1
    %s732 = scalar_lea.sflag [#allocation6], 1
    %733 = vsyncpa %s732, 1
    %734 = vsyncpa [#allocation4], 1
    %s735 = scalar_lea.sflag [#allocation4], 1
    %736 = vsyncpa %s735, 1

</llo_original>
